<compile_context>
chip_gen: v7x
topology: tpu7x:2x2x1
jax: 0.10.0
libtpu: 0.0.40
codegen_flags: <defaults>
</compile_context>

<pallas_src>
import functools

import jax
import jax.numpy as jnp
from jax.experimental import pallas as pl
from jax.experimental.pallas import tpu as pltpu


def _round_up(x, m):
    return (x + m - 1) // m * m


def _working_set_bytes(tile_h, W, Cin_p, Cout, in_bytes, out_bytes, cmp_bytes,
                       halo_blk):
    """Per-grid-step VMEM footprint estimate (scratch + double-buffered IO)."""
    L = tile_h * W
    A = _round_up(W + 1, 128) - W
    xe_len = _round_up(A + 2 * W + L + 1, 128)
    xe = Cin_p * xe_len * cmp_bytes                          # extended tile
    col = 3 * Cin_p * _round_up(L + 2, 128) * cmp_bytes      # im2col (3 copies)
    xin = 2 * Cin_p * (L + 2 * halo_blk) * in_bytes          # dbuf inputs
    wgt = 2 * 3 * Cout * 3 * Cin_p * cmp_bytes               # resident weights
    xout = 2 * Cout * L * out_bytes                          # dbuf output
    return xe + col + xin + wgt + xout


def _choose_tile_h(H, W, Cin_p, Cout, in_bytes, out_bytes, cmp_bytes,
                   budget_bytes=28 * 1024 * 1024):
    """Largest row tile whose working set fits the VMEM budget.

    The 28 MiB budget (plus the explicit 48 MiB vmem_limit_bytes) is safe on
    v5e/v6e (128 MiB physical) and on v7x (64 MiB per TensorCore).  Prefers
    >= 2 row tiles per image so both v7x TensorCores and the BlockSpec
    pipeline always have work.
    """
    halo_blk = W if W % 128 == 0 else 128
    cands = [th for th in range(1, H + 1)
             if H % th == 0 and (th * W) % 128 == 0]
    if not cands:
        return H                                 # degenerate: whole image/tile
    fitting = [th for th in cands
               if _working_set_bytes(th, W, Cin_p, Cout, in_bytes, out_bytes,
                                     cmp_bytes, halo_blk) <= budget_bytes]
    small_fitting = [th for th in fitting if th < H]
    if small_fitting:
        return max(small_fitting)
    if fitting:
        return max(fitting)
    return min(cands)


def _conv3x3_kernel(xm_ref, xt_ref, xb_ref, w_ref, o_ref, xe_ref, col_ref, *,
                    W, TILE_H, Cin, Cout, A, HALO_BLK, num_row_tiles, cdt):
    """One (batch, row-tile) grid step of the 3x3 same-padding conv.

    xm_ref : (1, Cin, TILE_H*W)       flattened main row tile (input dtype)
    xt_ref : (1, Cin, HALO_BLK)       block holding the row above the tile
    xb_ref : (1, Cin, HALO_BLK)       block holding the row below the tile
    w_ref  : (3, Cout, 3*Cin)         weights: [kw][co, kh*Cin + ci], compute dtype
    o_ref  : (1, Cout, TILE_H*W)      lane-dense output tile
    xe_ref : (Cin, XE_LEN)            row-extended tile   (VMEM scratch, cdt)
    col_ref: (3*Cin, TILE_H*W + 2)    3-copy im2col buffer (VMEM scratch, cdt)

    xe layout (per channel): top halo row at lane A, main tile at lane A+W
    (A+W is a multiple of 128 -> the big copy is an unmasked lane-dense store),
    bottom halo row at lane A+W+L.  Lanes A-1 and A+2W+L are read but never
    contribute (masked by ok_left/ok_right), so they are never written.
    """
    L = TILE_H * W
    t = pl.program_id(1)
    last = num_row_tiles - 1

    # ---- halo rows: pl.when-guarded writes (zeros at the image borders) ----
    @pl.when(t == 0)
    def _():
        xe_ref[:, A:A + W] = jnp.zeros((Cin, W), cdt)

    @pl.when(t > 0)
    def _():
        xe_ref[:, A:A + W] = xt_ref[0, :, HALO_BLK - W:HALO_BLK].astype(cdt)

    @pl.when(t == last)
    def _():
        xe_ref[:, A + W + L:A + 2 * W + L] = jnp.zeros((Cin, W), cdt)

    @pl.when(t < last)
    def _():
        xe_ref[:, A + W + L:A + 2 * W + L] = xb_ref[0, :, 0:W].astype(cdt)

    # ---- main tile: lane-aligned (A+W % 128 == 0), bf16-staged store -------
    xe_ref[:, A + W:A + W + L] = xm_ref[0].astype(cdt)

    # ---- im2col: only the 3 row-shifted (kh) windows, each L+2 lanes wide.
    # The kw shift is realized later as a static lane offset into col_ref,
    # so the store traffic is 3x(Cin,L+2) instead of 9x(Cin,L).
    for kh in range(3):
        src = A + kh * W - 1
        col_ref[kh * Cin:(kh + 1) * Cin, :] = xe_ref[:, src:src + L + 2]

    # ---- left/right image-border masks (per output lane) -------------------
    wpos = jax.lax.broadcasted_iota(jnp.int32, (1, L), 1) % W
    ok_left = wpos >= 1          # kw == 0 taps need column (w-1) >= 0
    ok_right = wpos <= W - 2     # kw == 2 taps need column (w+1) <  W

    # ---- three MXU matmuls (one per kw), f32 accumulation -------------------
    acc = jnp.dot(w_ref[1], col_ref[:, 1:1 + L],
                  preferred_element_type=jnp.float32)
    p0 = jnp.dot(w_ref[0], col_ref[:, 0:L],
                 preferred_element_type=jnp.float32)
    acc = acc + jnp.where(ok_left, p0, 0.0)
    p2 = jnp.dot(w_ref[2], col_ref[:, 2:2 + L],
                 preferred_element_type=jnp.float32)
    acc = acc + jnp.where(ok_right, p2, 0.0)

    o_ref[0] = acc.astype(o_ref.dtype)


def pixel_shuffle_nchw(x_nchw, r=2):
    """PyTorch nn.PixelShuffle semantics on NCHW input."""
    N, C, H, W = x_nchw.shape
    Cout = C // (r * r)
    x = x_nchw.reshape(N, Cout, r, r, H, W)
    x = jnp.transpose(x, (0, 1, 4, 2, 5, 3))  # N, Cout, H, r, W, r
    return x.reshape(N, Cout, H * r, W * r)


def conv3x3_pixelshuffle(x_nchw, weight_oihw, *, compute_dtype=jnp.bfloat16):
    """nn.Conv2d(Cin, Cout, 3, padding=1, bias=False) + nn.PixelShuffle(2)."""
    N, Cin, H, W = x_nchw.shape
    Cout = weight_oihw.shape[0]
    assert weight_oihw.shape == (Cout, Cin, 3, 3)
    assert Cout % 4 == 0, "PixelShuffle(2) needs Cout % 4 == 0"

    cdt = jnp.dtype(compute_dtype)
    cmp_bytes = cdt.itemsize
    # Pad Cin so the im2col sublane offsets (kh*Cin) are tile aligned.
    ch_align = 16 if cmp_bytes == 2 else 8
    Cin_p = _round_up(Cin, ch_align)
    if Cin_p != Cin:
        x_nchw = jnp.pad(x_nchw, ((0, 0), (0, Cin_p - Cin), (0, 0), (0, 0)))
        weight_oihw = jnp.pad(weight_oihw,
                              ((0, 0), (0, Cin_p - Cin), (0, 0), (0, 0)))

    in_bytes = jnp.dtype(x_nchw.dtype).itemsize
    out_bytes = in_bytes
    HW = H * W

    # ---- geometry ------------------------------------------------------------
    rows_fit_halo = (W % 128 == 0) or (128 % W == 0)
    if rows_fit_halo:
        TILE_H = _choose_tile_h(H, W, Cin_p, Cout, in_bytes, out_bytes,
                                cmp_bytes)
    else:
        TILE_H = H                 # rows would straddle 128-wide halo blocks
    L = TILE_H * W
    T = H // TILE_H
    if L % 128 == 0 and rows_fit_halo:
        HALO_BLK = W if W % 128 == 0 else 128
    else:
        assert TILE_H == H, "unsupported spatial geometry"
        HALO_BLK = HW
    assert W <= HALO_BLK and HW % HALO_BLK == 0 and L % HALO_BLK == 0
    LB = L // HALO_BLK             # halo blocks per row tile
    NB = HW // HALO_BLK            # halo blocks per image

    A = _round_up(W + 1, 128) - W  # top-halo lane offset; A + W is 128-aligned
    XE_LEN = _round_up(A + 2 * W + L + 1, 128)

    x_flat = x_nchw.reshape(N, Cin_p, HW)                    # free reshape
    # OIHW -> (kw, Cout, kh*Cin + ci), pre-cast to the compute dtype once.
    w_kw = jnp.transpose(weight_oihw, (3, 0, 2, 1)).reshape(3, Cout, 3 * Cin_p)
    w_kw = w_kw.astype(cdt)

    kernel = functools.partial(
        _conv3x3_kernel, W=W, TILE_H=TILE_H, Cin=Cin_p, Cout=Cout, A=A,
        HALO_BLK=HALO_BLK, num_row_tiles=T, cdt=cdt)

    cost = pl.CostEstimate(
        flops=2 * 9 * Cin_p * Cout * HW * N,
        transcendentals=0,
        bytes_accessed=(N * Cin_p * HW * in_bytes
                        + N * Cout * HW * out_bytes
                        + 3 * Cout * 3 * Cin_p * cmp_bytes))

    conv_flat = pl.pallas_call(
        kernel,
        out_shape=jax.ShapeDtypeStruct((N, Cout, HW), x_nchw.dtype),
        grid_spec=pltpu.PrefetchScalarGridSpec(
            num_scalar_prefetch=0,
            grid=(N, T),
            in_specs=[
                # main row tile, flattened spatial on lanes
                pl.BlockSpec((1, Cin_p, L), lambda n, t: (n, 0, t)),
                # halo block containing the row just above the tile
                pl.BlockSpec((1, Cin_p, HALO_BLK),
                             lambda n, t: (n, 0, jnp.maximum(t * LB - 1, 0))),
                # halo block containing the row just below the tile
                pl.BlockSpec((1, Cin_p, HALO_BLK),
                             lambda n, t: (n, 0, jnp.minimum((t + 1) * LB,
                                                             NB - 1))),
                # weights: constant block index -> DMA'd once, stays resident
                pl.BlockSpec((3, Cout, 3 * Cin_p), lambda n, t: (0, 0, 0)),
            ],
            out_specs=pl.BlockSpec((1, Cout, L), lambda n, t: (n, 0, t)),
            scratch_shapes=[
                pltpu.VMEM((Cin_p, XE_LEN), cdt),        # extended tile
                pltpu.VMEM((3 * Cin_p, L + 2), cdt),     # 3-copy im2col buffer
            ],
        ),
        compiler_params=pltpu.CompilerParams(
            dimension_semantics=("parallel", "parallel"),
            vmem_limit_bytes=48 * 1024 * 1024),
        cost_estimate=cost,
    )(x_flat, x_flat, x_flat, w_kw)

    conv = conv_flat.reshape(N, Cout, H, W)                  # free reshape
    return pixel_shuffle_nchw(conv, r=2)


def upsample_forward(x_nchw, weight_oihw, *, compute_dtype=jnp.bfloat16):
    """Equivalent of CPA_arch's Upsample(n_feat).forward on NCHW input.

    x_nchw:      (N, n_feat, H, W)
    weight_oihw: (2*n_feat, n_feat, 3, 3)  (PyTorch conv weight layout)
    returns:     (N, n_feat // 2, 2H, 2W)
    """
    return conv3x3_pixelshuffle(x_nchw, weight_oihw, compute_dtype=compute_dtype)


def _reference(x_nchw, weight_oihw):
    """Pure-JAX reference (XLA conv) for correctness checking."""
    conv = jax.lax.conv_general_dilated(
        x_nchw, weight_oihw,
        window_strides=(1, 1), padding=((1, 1), (1, 1)),
        dimension_numbers=("NCHW", "OIHW", "NCHW"))
    return pixel_shuffle_nchw(conv, r=2)


if __name__ == "__main__":
    key = jax.random.PRNGKey(0)
    k_x, k_w = jax.random.split(key)

    N, n_feat, H, W = 2, 4, 16, 16
    x = jax.random.normal(k_x, (N, n_feat, H, W), dtype=jnp.float32)
    # Conv2d(n_feat, n_feat*2, 3) weight, no bias. Deterministic init.
    fan_in = n_feat * 3 * 3
    weight = jax.random.normal(
        k_w, (2 * n_feat, n_feat, 3, 3),
        dtype=jnp.float32) * (1.0 / fan_in) ** 0.5

    ref = _reference(x, weight)

    # Exact path (f32 staging): validates the tiling / halo / im2col indexing.
    out_f32 = jax.jit(functools.partial(
        upsample_forward, compute_dtype=jnp.float32))(x, weight)
    out_f32 = jax.block_until_ready(out_f32)
    assert out_f32.shape == (N, n_feat // 2, 2 * H, 2 * W), out_f32.shape
    assert jnp.allclose(out_f32, ref, atol=1e-3, rtol=1e-3), "f32 mismatch"

    # Fast path (default, bf16 staging + f32 accumulation).
    out = jax.jit(upsample_forward)(x, weight)
    out = jax.block_until_ready(out)
    assert out.shape == (N, n_feat // 2, 2 * H, 2 * W), out.shape
    assert jnp.allclose(out, ref, atol=5e-2, rtol=5e-2), "bf16 mismatch"

    print("KERNEL_OK")
</pallas_src>

<mosaic_0001>
module attributes {stable_mosaic.version = 11 : i64} {
  func.func @_conv3x3_kernel(%arg0: i32, %arg1: i32, %arg2: memref<1x8x128xf32, #tpu.memory_space<vmem>>, %arg3: memref<1x8x128xf32, #tpu.memory_space<vmem>>, %arg4: memref<1x8x128xf32, #tpu.memory_space<vmem>>, %arg5: memref<3x8x24xf32, #tpu.memory_space<vmem>>, %arg6: memref<1x8x128xf32, #tpu.memory_space<vmem>>, %arg7: memref<8x384xf32, #tpu.memory_space<vmem>>, %arg8: memref<24x130xf32, #tpu.memory_space<vmem>>) attributes {dimension_semantics = [#tpu.dimension_semantics<parallel>, #tpu.dimension_semantics<parallel>], iteration_bounds = array<i64: 2, 2>, scalar_prefetch = 0 : i64, scratch_operands = 2 : i64, tpu.core_type = #tpu.core_type<tc>, window_params = [{transform_indices = @transform_0, window_bounds = array<i64: 1, 8, 128>}, {transform_indices = @transform_1, window_bounds = array<i64: 1, 8, 128>}, {transform_indices = @transform_2, window_bounds = array<i64: 1, 8, 128>}, {pipeline_mode = #tpu.pipeline_mode<synchronous>, transform_indices = @transform_3, window_bounds = array<i64: 3, 8, 24>}, {transform_indices = @transform_4, window_bounds = array<i64: 1, 8, 128>}]} {
    %c0_i32 = arith.constant 0 : i32
    %0 = arith.cmpi eq, %arg1, %c0_i32 : i32
    %1 = arith.extui %0 : i1 to i32
    %c0_i32_0 = arith.constant 0 : i32
    %2 = arith.cmpi ne, %1, %c0_i32_0 : i32
    scf.if %2 {
      %cst_42 = arith.constant 0.000000e+00 : f32
      %67 = vector.broadcast %cst_42 : f32 to vector<8x16xf32>
      %c0_43 = arith.constant 0 : index
      %c112 = arith.constant 112 : index
      %68 = vector.load %arg7[%c0_43, %c112] : memref<8x384xf32, #tpu.memory_space<vmem>>, vector<8x16xf32>
      tpu.vector_store %arg7[%c0_43, %c112], %67 {strides = array<i32>} : memref<8x384xf32, #tpu.memory_space<vmem>>, vector<8x16xf32>,
    } else {
    }
    %c0_i32_1 = arith.constant 0 : i32
    %3 = arith.cmpi sgt, %arg1, %c0_i32_1 : i32
    %4 = arith.extui %3 : i1 to i32
    %c0_i32_2 = arith.constant 0 : i32
    %5 = arith.cmpi ne, %4, %c0_i32_2 : i32
    scf.if %5 {
      %c0_42 = arith.constant 0 : index
      %c0_43 = arith.constant 0 : index
      %c112 = arith.constant 112 : index
      %67 = vector.load %arg3[%c0_42, %c0_43, %c112] : memref<1x8x128xf32, #tpu.memory_space<vmem>>, vector<1x8x16xf32>
      %68 = vector.shape_cast %67 : vector<1x8x16xf32> to vector<8x16xf32>
      %c0_44 = arith.constant 0 : index
      %c112_45 = arith.constant 112 : index
      %69 = vector.load %arg7[%c0_44, %c112_45] : memref<8x384xf32, #tpu.memory_space<vmem>>, vector<8x16xf32>
      tpu.vector_store %arg7[%c0_44, %c112_45], %68 {strides = array<i32>} : memref<8x384xf32, #tpu.memory_space<vmem>>, vector<8x16xf32>,
    } else {
    }
    %c1_i32 = arith.constant 1 : i32
    %6 = arith.cmpi eq, %arg1, %c1_i32 : i32
    %7 = arith.extui %6 : i1 to i32
    %c0_i32_3 = arith.constant 0 : i32
    %8 = arith.cmpi ne, %7, %c0_i32_3 : i32
    scf.if %8 {
      %cst_42 = arith.constant 0.000000e+00 : f32
      %67 = vector.broadcast %cst_42 : f32 to vector<8x16xf32>
      %c0_43 = arith.constant 0 : index
      %c256 = arith.constant 256 : index
      %68 = vector.load %arg7[%c0_43, %c256] : memref<8x384xf32, #tpu.memory_space<vmem>>, vector<8x16xf32>
      tpu.vector_store %arg7[%c0_43, %c256], %67 {strides = array<i32>} : memref<8x384xf32, #tpu.memory_space<vmem>>, vector<8x16xf32>,
    } else {
    }
    %c1_i32_4 = arith.constant 1 : i32
    %9 = arith.cmpi slt, %arg1, %c1_i32_4 : i32
    %10 = arith.extui %9 : i1 to i32
    %c0_i32_5 = arith.constant 0 : i32
    %11 = arith.cmpi ne, %10, %c0_i32_5 : i32
    scf.if %11 {
      %c0_42 = arith.constant 0 : index
      %c0_43 = arith.constant 0 : index
      %c0_44 = arith.constant 0 : index
      %67 = vector.load %arg4[%c0_42, %c0_43, %c0_44] : memref<1x8x128xf32, #tpu.memory_space<vmem>>, vector<1x8x16xf32>
      %68 = vector.shape_cast %67 : vector<1x8x16xf32> to vector<8x16xf32>
      %c0_45 = arith.constant 0 : index
      %c256 = arith.constant 256 : index
      %69 = vector.load %arg7[%c0_45, %c256] : memref<8x384xf32, #tpu.memory_space<vmem>>, vector<8x16xf32>
      tpu.vector_store %arg7[%c0_45, %c256], %68 {strides = array<i32>} : memref<8x384xf32, #tpu.memory_space<vmem>>, vector<8x16xf32>,
    } else {
    }
    %c0 = arith.constant 0 : index
    %c0_6 = arith.constant 0 : index
    %c0_7 = arith.constant 0 : index
    %12 = vector.load %arg2[%c0, %c0_6, %c0_7] : memref<1x8x128xf32, #tpu.memory_space<vmem>>, vector<1x8x128xf32>
    %13 = vector.shape_cast %12 : vector<1x8x128xf32> to vector<8x128xf32>
    %c0_8 = arith.constant 0 : index
    %c128 = arith.constant 128 : index
    %14 = vector.load %arg7[%c0_8, %c128] : memref<8x384xf32, #tpu.memory_space<vmem>>, vector<8x128xf32>
    tpu.vector_store %arg7[%c0_8, %c128], %13 {strides = array<i32>} : memref<8x384xf32, #tpu.memory_space<vmem>>, vector<8x128xf32>,
    %c0_9 = arith.constant 0 : index
    %c111 = arith.constant 111 : index
    %15 = vector.load %arg7[%c0_9, %c111] : memref<8x384xf32, #tpu.memory_space<vmem>>, vector<8x130xf32>
    %c0_10 = arith.constant 0 : index
    %c0_11 = arith.constant 0 : index
    %16 = vector.load %arg8[%c0_10, %c0_11] : memref<24x130xf32, #tpu.memory_space<vmem>>, vector<8x130xf32>
    tpu.vector_store %arg8[%c0_10, %c0_11], %15 {strides = array<i32>} : memref<24x130xf32, #tpu.memory_space<vmem>>, vector<8x130xf32>,
    %c0_12 = arith.constant 0 : index
    %c127 = arith.constant 127 : index
    %17 = vector.load %arg7[%c0_12, %c127] : memref<8x384xf32, #tpu.memory_space<vmem>>, vector<8x130xf32>
    %c8 = arith.constant 8 : index
    %c0_13 = arith.constant 0 : index
    %18 = vector.load %arg8[%c8, %c0_13] : memref<24x130xf32, #tpu.memory_space<vmem>>, vector<8x130xf32>
    tpu.vector_store %arg8[%c8, %c0_13], %17 {strides = array<i32>} : memref<24x130xf32, #tpu.memory_space<vmem>>, vector<8x130xf32>,
    %c0_14 = arith.constant 0 : index
    %c143 = arith.constant 143 : index
    %19 = vector.load %arg7[%c0_14, %c143] : memref<8x384xf32, #tpu.memory_space<vmem>>, vector<8x130xf32>
    %c16 = arith.constant 16 : index
    %c0_15 = arith.constant 0 : index
    %20 = vector.load %arg8[%c16, %c0_15] : memref<24x130xf32, #tpu.memory_space<vmem>>, vector<8x130xf32>
    tpu.vector_store %arg8[%c16, %c0_15], %19 {strides = array<i32>} : memref<24x130xf32, #tpu.memory_space<vmem>>, vector<8x130xf32>,
    %21 = tpu.iota {dimensions = array<i32: 1>} : vector<1x128xi32>
    %c16_i32 = arith.constant 16 : i32
    %c0_i32_16 = arith.constant 0 : i32
    %22 = arith.cmpi eq, %c16_i32, %c0_i32_16 : i32
    %c1_i32_17 = arith.constant 1 : i32
    %23 = arith.select %22, %c1_i32_17, %c16_i32 : i32
    %24 = vector.broadcast %23 : i32 to vector<1x128xi32>
    %25 = arith.remsi %21, %24 : vector<1x128xi32>
    %c0_i32_18 = arith.constant 0 : i32
    %26 = vector.broadcast %c0_i32_18 : i32 to vector<1x128xi32>
    %27 = arith.cmpi ne, %25, %26 : vector<1x128xi32>
    %c0_i32_19 = arith.constant 0 : i32
    %28 = vector.broadcast %c0_i32_19 : i32 to vector<1x128xi32>
    %29 = arith.cmpi slt, %25, %28 : vector<1x128xi32>
    %c0_i32_20 = arith.constant 0 : i32
    %30 = arith.cmpi slt, %23, %c0_i32_20 : i32
    %31 = vector.broadcast %30 : i1 to vector<1x128xi1>
    %32 = vector.broadcast %31 : vector<1x128xi1> to vector<1x128xi1>
    %33 = arith.xori %29, %32 : vector<1x128xi1>
    %34 = arith.andi %33, %27 : vector<1x128xi1>
    %35 = vector.broadcast %23 : i32 to vector<1x128xi32>
    %36 = arith.addi %25, %35 : vector<1x128xi32>
    %37 = arith.select %34, %36, %25 : vector<1x128xi1>, vector<1x128xi32>
    %c1_i32_21 = arith.constant 1 : i32
    %38 = vector.broadcast %c1_i32_21 : i32 to vector<1x128xi32>
    %39 = arith.cmpi sge, %37, %38 : vector<1x128xi32>
    %c14_i32 = arith.constant 14 : i32
    %40 = vector.broadcast %c14_i32 : i32 to vector<1x128xi32>
    %41 = arith.cmpi sle, %37, %40 : vector<1x128xi32>
    %c1 = arith.constant 1 : index
    %c0_22 = arith.constant 0 : index
    %c0_23 = arith.constant 0 : index
    %42 = vector.load %arg5[%c1, %c0_22, %c0_23] : memref<3x8x24xf32, #tpu.memory_space<vmem>>, vector<1x8x24xf32>
    %43 = vector.shape_cast %42 : vector<1x8x24xf32> to vector<8x24xf32>
    %c0_24 = arith.constant 0 : index
    %c1_25 = arith.constant 1 : index
    %44 = vector.load %arg8[%c0_24, %c1_25] : memref<24x130xf32, #tpu.memory_space<vmem>>, vector<24x128xf32>
    %cst = arith.constant dense<0.000000e+00> : vector<8x128xf32>
    %45 = tpu.matmul %43, %44, %cst {dimension_numbers = #tpu.dot_dimension_numbers<[1], [0], [0], [1], [0, 0, 1, 1], [], []>} : vector<8x24xf32>, vector<24x128xf32>, vector<8x128xf32> -> vector<8x128xf32>
    %c0_26 = arith.constant 0 : index
    %c0_27 = arith.constant 0 : index
    %c0_28 = arith.constant 0 : index
    %46 = vector.load %arg5[%c0_26, %c0_27, %c0_28] : memref<3x8x24xf32, #tpu.memory_space<vmem>>, vector<1x8x24xf32>
    %47 = vector.shape_cast %46 : vector<1x8x24xf32> to vector<8x24xf32>
    %c0_29 = arith.constant 0 : index
    %c0_30 = arith.constant 0 : index
    %48 = vector.load %arg8[%c0_29, %c0_30] : memref<24x130xf32, #tpu.memory_space<vmem>>, vector<24x128xf32>
    %cst_31 = arith.constant dense<0.000000e+00> : vector<8x128xf32>
    %49 = tpu.matmul %47, %48, %cst_31 {dimension_numbers = #tpu.dot_dimension_numbers<[1], [0], [0], [1], [0, 0, 1, 1], [], []>} : vector<8x24xf32>, vector<24x128xf32>, vector<8x128xf32> -> vector<8x128xf32>
    %cst_32 = arith.constant 0.000000e+00 : f32
    %50 = vector.shape_cast %39 : vector<1x128xi1> to vector<1x128xi1>
    %51 = vector.broadcast %50 : vector<1x128xi1> to vector<8x128xi1>
    %52 = vector.broadcast %cst_32 : f32 to vector<8x128xf32>
    %53 = arith.select %51, %49, %52 : vector<8x128xi1>, vector<8x128xf32>
    %54 = arith.addf %45, %53 : vector<8x128xf32>
    %c2 = arith.constant 2 : index
    %c0_33 = arith.constant 0 : index
    %c0_34 = arith.constant 0 : index
    %55 = vector.load %arg5[%c2, %c0_33, %c0_34] : memref<3x8x24xf32, #tpu.memory_space<vmem>>, vector<1x8x24xf32>
    %56 = vector.shape_cast %55 : vector<1x8x24xf32> to vector<8x24xf32>
    %c0_35 = arith.constant 0 : index
    %c2_36 = arith.constant 2 : index
    %57 = vector.load %arg8[%c0_35, %c2_36] : memref<24x130xf32, #tpu.memory_space<vmem>>, vector<24x128xf32>
    %cst_37 = arith.constant dense<0.000000e+00> : vector<8x128xf32>
    %58 = tpu.matmul %56, %57, %cst_37 {dimension_numbers = #tpu.dot_dimension_numbers<[1], [0], [0], [1], [0, 0, 1, 1], [], []>} : vector<8x24xf32>, vector<24x128xf32>, vector<8x128xf32> -> vector<8x128xf32>
    %cst_38 = arith.constant 0.000000e+00 : f32
    %59 = vector.shape_cast %41 : vector<1x128xi1> to vector<1x128xi1>
    %60 = vector.broadcast %59 : vector<1x128xi1> to vector<8x128xi1>
    %61 = vector.broadcast %cst_38 : f32 to vector<8x128xf32>
    %62 = arith.select %60, %58, %61 : vector<8x128xi1>, vector<8x128xf32>
    %63 = arith.addf %54, %62 : vector<8x128xf32>
    %c0_39 = arith.constant 0 : index
    %c0_40 = arith.constant 0 : index
    %c0_41 = arith.constant 0 : index
    %64 = vector.load %arg6[%c0_39, %c0_40, %c0_41] : memref<1x8x128xf32, #tpu.memory_space<vmem>>, vector<1x8x128xf32>
    %65 = vector.shape_cast %64 : vector<1x8x128xf32> to vector<8x128xf32>
    %66 = vector.shape_cast %63 : vector<8x128xf32> to vector<1x8x128xf32>
    tpu.vector_store %arg6[%c0_39, %c0_40, %c0_41], %66 {strides = array<i32>} : memref<1x8x128xf32, #tpu.memory_space<vmem>>, vector<1x8x128xf32>,
    return
  }
  func.func @transform_0(%arg0: i32, %arg1: i32) -> (i32, i32, i32) {
    %c0_i32 = arith.constant 0 : i32
    %c0_i32_0 = arith.constant 0 : i32
    return %arg0, %c0_i32, %arg1 : i32, i32, i32
  }
  func.func @transform_1(%arg0: i32, %arg1: i32) -> (i32, i32, i32) {
    %c1_i32 = arith.constant 1 : i32
    %0 = arith.muli %arg1, %c1_i32 : i32
    %c1_i32_0 = arith.constant 1 : i32
    %1 = arith.subi %0, %c1_i32_0 : i32
    %c0_i32 = arith.constant 0 : i32
    %2 = arith.maxsi %1, %c0_i32 : i32
    %c0_i32_1 = arith.constant 0 : i32
    %c0_i32_2 = arith.constant 0 : i32
    return %arg0, %c0_i32_1, %2 : i32, i32, i32
  }
  func.func @transform_2(%arg0: i32, %arg1: i32) -> (i32, i32, i32) {
    %c1_i32 = arith.constant 1 : i32
    %0 = arith.addi %arg1, %c1_i32 : i32
    %c1_i32_0 = arith.constant 1 : i32
    %1 = arith.muli %0, %c1_i32_0 : i32
    %c1_i32_1 = arith.constant 1 : i32
    %2 = arith.minsi %1, %c1_i32_1 : i32
    %c0_i32 = arith.constant 0 : i32
    %c0_i32_2 = arith.constant 0 : i32
    return %arg0, %c0_i32, %2 : i32, i32, i32
  }
  func.func @transform_3(%arg0: i32, %arg1: i32) -> (i32, i32, i32) {
    %c0_i32 = arith.constant 0 : i32
    %c0_i32_0 = arith.constant 0 : i32
    %c0_i32_1 = arith.constant 0 : i32
    %c0_i32_2 = arith.constant 0 : i32
    return %c0_i32, %c0_i32_0, %c0_i32_1 : i32, i32, i32
  }
  func.func @transform_4(%arg0: i32, %arg1: i32) -> (i32, i32, i32) {
    %c0_i32 = arith.constant 0 : i32
    %c0_i32_0 = arith.constant 0 : i32
    return %arg0, %c0_i32, %arg1 : i32, i32, i32
  }
}

</mosaic_0001>

<llo_original>
// kernel: upsample_forward.1
$region0: #{upsample_forward.1}
  #allocation0 [shape = 'u32[]', space=smem, size = 0x4, offset = 0x4, fixed_abs, tag = 'smem constant byte address 0x4 - core index']
  #allocation1 [shape = 'u32[144,128]{1,0:T(1,128)}', space=vmem, size = 0x12000, scoped, tag = 'internal scratch']
  #allocation2 [shape = 'f32[8,384]{1,0:T(8,128)}', space=vmem, size = 0x3000, scoped, tag = 'scratch operand']
  #allocation3 [shape = 'f32[24,130]{1,0:T(8,128)}', space=vmem, size = 0x6000, scoped, tag = 'scratch operand']
  %s0 = inlined_call_operand.vmem [shape: f32[2,8,256], index: 0, kind: input, shape index: {}, may-alias: {0,1,2}]
  %s1 = inlined_call_operand.vmem [shape: f32[2,8,256], index: 1, kind: input, shape index: {}, may-alias: {0,1,2}]
  %s2 = inlined_call_operand.vmem [shape: f32[2,8,256], index: 2, kind: input, shape index: {}, may-alias: {0,1,2}]
  %s3 = inlined_call_operand.vmem [shape: f32[3,8,24], index: 3, kind: input, shape index: {}]
  %s4 = inlined_call_operand.vmem [shape: f32[2,8,256], index: 4, kind: output, shape index: {}]
  %s5 = sld [smem:[#allocation0]]
  $region65: #{upsample_forward.1} parent=0
    _
  %s7 = ssub.s32 1, %s5
  %s8 = scalar_select 0, %s7, %s5
  loop: start=0, step=1, limit=6
  $region2: #{upsample_forward.1} parent=0 // loop_pre_header
    _
  $region3: #{upsample_forward.1} parent=0 // loop_header
    %s10 = sphi 0, %s14
    %p11 = scmp.ge.s32.totalorder %s10, 6
    %s17 = sphi 0, %s29
    %s18 = sphi 0, %s25
    %s19 = sphi 0, %s17
    %s20 = sphi 0, %s18
    %s21 = sphi 0, %s19
    %s22 = sphi 0, %s20
    %s34 = sphi 0, %s36
    %s37 = sphi 0, %s34
    %s38 = sphi 0, %s37
    %s54 = sphi 0, %s38
    %s68 = sphi 0, %s70
    %s71 = sphi 0, %s68
    %s72 = sphi 0, %s71
    %s88 = sphi 0, %s72
    %s102 = sphi 0, %s104
    %s105 = sphi 0, %s102
    %s106 = sphi 0, %s105
    %s122 = sphi 0, %s106
    %s126 = sphi 0, %s126
    %s128 = sphi 0, %s126
    %s129 = sphi 0, %s128
    %s143 = sphi 0, %s129
    %s151 = sphi 0, %s153
    %s154 = sphi 0, %s151
    %s155 = sphi 0, %s154
    %s171 = sphi 0, %s155
  $region4: #{upsample_forward.1} parent=0 // loop_header_branch
    %13 = sbr.rel (%p11) target = $region8
  $region5: #{upsample_forward.1} parent=0 // loop_body
    %s15 = ssub.s32 %s10, 1
    %s16 = ssub.s32 %s10, 2
    %s23 = sadd.s32 1, %s18
    %p24 = scmp.ge.s32.totalorder %s23, 2
    %s25 = scalar_select %p24, 0, %s23
    %s26 = sadd.s32 1, %s17
    %s27 = scalar_select %p24, %s26, %s17
    %p28 = scmp.ge.s32.totalorder %s27, 2
    %s29 = scalar_select %p28, 0, %s27
    %s30 = ssub.s32 %s17, %s29
    %s31 = ssub.s32 %s18, %s25
    %s32 = sor.u32 %s30, %s31
    %p33 = scmp.eq.s32.totalorder %s32, 0
    %s35 = sadd.s32 %s34, 1
    %s36 = scalar_select %p33, %s34, %s35
    %p39 = pneg %p33
    %p40 = scmp.eq.s32.totalorder %s10, 3
    %p41 = por %p39, %p40
    %p42 = scmp.ne.s32.totalorder %s34, %s37
    %p43 = scmp.eq.s32.totalorder %s10, 0
    %p44 = por %p42, %p43
    %p45 = scmp.ne.s32.totalorder %s34, %s37
    %p46 = scmp.eq.s32.totalorder %s15, 3
    %p47 = por %p45, %p46
    %p48 = scmp.ne.s32.totalorder %s37, %s38
    %p49 = scmp.eq.s32.totalorder %s15, 0
    %p50 = por %p48, %p49
    %p51 = scmp.ne.s32.totalorder %s37, %s38
    %p52 = scmp.eq.s32.totalorder %s16, 3
    %p53 = por %p51, %p52
    %p55 = scmp.ne.s32.totalorder %s38, %s54
    %p56 = scmp.eq.s32.totalorder %s16, 0
    %p57 = por %p55, %p56
    %s58 = ssub.s32 %s18, 1
    %p59 = scmp.gt.s32.totalorder %s58, 0
    %s60 = scalar_select %p59, %s58, 0
    %s61 = ssub.s32 %s25, 1
    %p62 = scmp.gt.s32.totalorder %s61, 0
    %s63 = scalar_select %p62, %s61, 0
    %s64 = ssub.s32 %s17, %s29
    %s65 = ssub.s32 %s60, %s63
    %s66 = sor.u32 %s64, %s65
    %p67 = scmp.eq.s32.totalorder %s66, 0
    %s69 = sadd.s32 %s68, 1
    %s70 = scalar_select %p67, %s68, %s69
    %p73 = pneg %p67
    %p74 = scmp.eq.s32.totalorder %s10, 3
    %p75 = por %p73, %p74
    %p76 = scmp.ne.s32.totalorder %s68, %s71
    %p77 = scmp.eq.s32.totalorder %s10, 0
    %p78 = por %p76, %p77
    %p79 = scmp.ne.s32.totalorder %s68, %s71
    %p80 = scmp.eq.s32.totalorder %s15, 3
    %p81 = por %p79, %p80
    %p82 = scmp.ne.s32.totalorder %s71, %s72
    %p83 = scmp.eq.s32.totalorder %s15, 0
    %p84 = por %p82, %p83
    %p85 = scmp.ne.s32.totalorder %s71, %s72
    %p86 = scmp.eq.s32.totalorder %s16, 3
    %p87 = por %p85, %p86
    %p89 = scmp.ne.s32.totalorder %s72, %s88
    %p90 = scmp.eq.s32.totalorder %s16, 0
    %p91 = por %p89, %p90
    %s92 = sadd.s32 %s18, 1
    %p93 = scmp.lt.s32.totalorder %s92, 1
    %s94 = scalar_select %p93, %s92, 1
    %s95 = sadd.s32 %s25, 1
    %p96 = scmp.lt.s32.totalorder %s95, 1
    %s97 = scalar_select %p96, %s95, 1
    %s98 = ssub.s32 %s17, %s29
    %s99 = ssub.s32 %s94, %s97
    %s100 = sor.u32 %s98, %s99
    %p101 = scmp.eq.s32.totalorder %s100, 0
    %s103 = sadd.s32 %s102, 1
    %s104 = scalar_select %p101, %s102, %s103
    %p107 = pneg %p101
    %p108 = scmp.eq.s32.totalorder %s10, 3
    %p109 = por %p107, %p108
    %p110 = scmp.ne.s32.totalorder %s102, %s105
    %p111 = scmp.eq.s32.totalorder %s10, 0
    %p112 = por %p110, %p111
    %p113 = scmp.ne.s32.totalorder %s102, %s105
    %p114 = scmp.eq.s32.totalorder %s15, 3
    %p115 = por %p113, %p114
    %p116 = scmp.ne.s32.totalorder %s105, %s106
    %p117 = scmp.eq.s32.totalorder %s15, 0
    %p118 = por %p116, %p117
    %p119 = scmp.ne.s32.totalorder %s105, %s106
    %p120 = scmp.eq.s32.totalorder %s16, 3
    %p121 = por %p119, %p120
    %p123 = scmp.ne.s32.totalorder %s106, %s122
    %p124 = scmp.eq.s32.totalorder %s16, 0
    %p125 = por %p123, %p124
    %s127 = sadd.s32 %s126, 1
    %p130 = scmp.eq.s32.totalorder %s10, 3
    %p131 = scmp.ne.s32.totalorder %s126, %s128
    %p132 = scmp.eq.s32.totalorder %s10, 0
    %p133 = por %p131, %p132
    %p134 = scmp.ne.s32.totalorder %s126, %s128
    %p135 = scmp.eq.s32.totalorder %s15, 3
    %p136 = por %p134, %p135
    %p137 = scmp.ne.s32.totalorder %s128, %s129
    %p138 = scmp.eq.s32.totalorder %s15, 0
    %p139 = por %p137, %p138
    %p140 = scmp.ne.s32.totalorder %s128, %s129
    %p141 = scmp.eq.s32.totalorder %s16, 3
    %p142 = por %p140, %p141
    %p144 = scmp.ne.s32.totalorder %s129, %s143
    %p145 = scmp.eq.s32.totalorder %s16, 0
    %p146 = por %p144, %p145
    %s147 = ssub.s32 %s17, %s29
    %s148 = ssub.s32 %s18, %s25
    %s149 = sor.u32 %s147, %s148
    %p150 = scmp.eq.s32.totalorder %s149, 0
    %s152 = sadd.s32 %s151, 1
    %s153 = scalar_select %p150, %s151, %s152
    %p156 = pneg %p150
    %p157 = scmp.eq.s32.totalorder %s10, 3
    %p158 = por %p156, %p157
    %p159 = scmp.ne.s32.totalorder %s151, %s154
    %p160 = scmp.eq.s32.totalorder %s10, 0
    %p161 = por %p159, %p160
    %p162 = scmp.ne.s32.totalorder %s151, %s154
    %p163 = scmp.eq.s32.totalorder %s15, 3
    %p164 = por %p162, %p163
    %p165 = scmp.ne.s32.totalorder %s154, %s155
    %p166 = scmp.eq.s32.totalorder %s15, 0
    %p167 = por %p165, %p166
    %p168 = scmp.ne.s32.totalorder %s154, %s155
    %p169 = scmp.eq.s32.totalorder %s16, 3
    %p170 = por %p168, %p169
    %p172 = scmp.ne.s32.totalorder %s155, %s171
    %p173 = scmp.eq.s32.totalorder %s16, 0
    %p174 = por %p172, %p173
    %p175 = scmp.le.s32.totalorder 1, %s10
    %p176 = scmp.lt.s32.totalorder %s10, 5
    %p177 = pnand %p175, %p176
    %p178 = pneg %p177
    // Predicated region
    $region9: #{upsample_forward.1} parent=5 // pred_check
      _
    $region10: #{upsample_forward.1} parent=5 // pred_check_branch
      %180 = sbr.rel (%p177) target = $region12
    $region11: #{upsample_forward.1} parent=5 // pred_region
      %s181 = ssub.s32 %s10, 1
      // Predicated region
      $region13: #{upsample_forward.1} parent=11 // pred_check
        %p182 = pneg %p139
      $region14: #{upsample_forward.1} parent=11 // pred_check_branch
        %184 = sbr.rel (%p182) target = $region16
      $region15: #{upsample_forward.1} parent=11 // pred_region
        _
      $region16: #{upsample_forward.1} parent=11 // pred_fallthru
        _
    $region12: #{upsample_forward.1} parent=5 // pred_fallthru
      _
    %p185 = scmp.lt.s32.totalorder %s10, 4
    // Predicated region
    $region17: #{upsample_forward.1} parent=5 // pred_check
      %p186 = pneg %p185
    $region18: #{upsample_forward.1} parent=5 // pred_check_branch
      %188 = sbr.rel (%p186) target = $region20
    $region19: #{upsample_forward.1} parent=5 // pred_region
      // Predicated region
      $region21: #{upsample_forward.1} parent=19 // pred_check
        %p189 = pneg %p44
      $region22: #{upsample_forward.1} parent=19 // pred_check_branch
        %191 = sbr.rel (%p189) target = $region24
      $region23: #{upsample_forward.1} parent=19 // pred_region
        %p192 = scmp.lt.s32.totalorder %s17, 1
        %s193 = scalar_select %p192, %s17, 1
        %p194 = scmp.lt.s32.totalorder %s18, 1
        %s195 = scalar_select %p194, %s18, 1
        %s196 = smul.addr %s193, 2
        %s197 = sadd.s32 %s195, %s196
        %s198 = smul.addr %s197, 8
        %s199 = scalar_lea.vmem %s0, %s198
      $region24: #{upsample_forward.1} parent=19 // pred_fallthru
        _
      // Predicated region
      $region25: #{upsample_forward.1} parent=19 // pred_check
        %p200 = pneg %p78
      $region26: #{upsample_forward.1} parent=19 // pred_check_branch
        %202 = sbr.rel (%p200) target = $region28
      $region27: #{upsample_forward.1} parent=19 // pred_region
        %s203 = ssub.s32 %s18, 1
        %p204 = scmp.gt.s32.totalorder %s203, 0
        %s205 = scalar_select %p204, %s203, 0
        %p206 = scmp.lt.s32.totalorder %s17, 1
        %s207 = scalar_select %p206, %s17, 1
        %p208 = scmp.lt.s32.totalorder %s205, 1
        %s209 = scalar_select %p208, %s205, 1
        %s210 = smul.addr %s207, 2
        %s211 = sadd.s32 %s209, %s210
        %s212 = smul.addr %s211, 8
        %s213 = scalar_lea.vmem %s1, %s212
        %s214 = ssub.s32 %s18, 1
        %p215 = scmp.gt.s32.totalorder %s214, 0
        %s216 = scalar_select %p215, %s214, 0
      $region28: #{upsample_forward.1} parent=19 // pred_fallthru
        _
      // Predicated region
      $region29: #{upsample_forward.1} parent=19 // pred_check
        %p217 = pneg %p112
      $region30: #{upsample_forward.1} parent=19 // pred_check_branch
        %219 = sbr.rel (%p217) target = $region32
      $region31: #{upsample_forward.1} parent=19 // pred_region
        %s220 = sadd.s32 %s18, 1
        %p221 = scmp.lt.s32.totalorder %s220, 1
        %s222 = scalar_select %p221, %s220, 1
        %p223 = scmp.lt.s32.totalorder %s17, 1
        %s224 = scalar_select %p223, %s17, 1
        %p225 = scmp.lt.s32.totalorder %s222, 1
        %s226 = scalar_select %p225, %s222, 1
        %s227 = smul.addr %s224, 2
        %s228 = sadd.s32 %s226, %s227
        %s229 = smul.addr %s228, 8
        %s230 = scalar_lea.vmem %s2, %s229
        %s231 = sadd.s32 %s18, 1
        %p232 = scmp.lt.s32.totalorder %s231, 1
        %s233 = scalar_select %p232, %s231, 1
      $region32: #{upsample_forward.1} parent=19 // pred_fallthru
        _
    $region20: #{upsample_forward.1} parent=5 // pred_fallthru
      _
    %p234 = scmp.le.s32.totalorder 1, %s10
    %p235 = scmp.lt.s32.totalorder %s10, 5
    %p236 = pnand %p234, %p235
    %p237 = pneg %p236
    // Predicated region
    $region33: #{upsample_forward.1} parent=5 // pred_check
      _
    $region34: #{upsample_forward.1} parent=5 // pred_check_branch
      %239 = sbr.rel (%p236) target = $region36
    $region35: #{upsample_forward.1} parent=5 // pred_region
      %s240 = ssub.s32 %s10, 1
      %p241 = scmp.lt.s32.totalorder %s19, 1
      %s242 = scalar_select %p241, %s19, 1
      %p243 = scmp.lt.s32.totalorder %s20, 1
      %s244 = scalar_select %p243, %s20, 1
      %s245 = smul.addr %s242, 2
      %s246 = sadd.s32 %s244, %s245
      %s247 = smul.addr %s246, 8
      %s248 = scalar_lea.vmem %s0, %s247
      %p249 = pneg %p50
      %p250 = pneg %p47
      %s251 = ssub.s32 %s20, 1
      %p252 = scmp.gt.s32.totalorder %s251, 0
      %s253 = scalar_select %p252, %s251, 0
      %p254 = scmp.lt.s32.totalorder %s19, 1
      %s255 = scalar_select %p254, %s19, 1
      %p256 = scmp.lt.s32.totalorder %s253, 1
      %s257 = scalar_select %p256, %s253, 1
      %s258 = smul.addr %s255, 2
      %s259 = sadd.s32 %s257, %s258
      %s260 = smul.addr %s259, 8
      %s261 = scalar_lea.vmem %s1, %s260
      %p262 = pneg %p84
      %p263 = pneg %p81
      %s264 = sadd.s32 %s20, 1
      %p265 = scmp.lt.s32.totalorder %s264, 1
      %s266 = scalar_select %p265, %s264, 1
      %p267 = scmp.lt.s32.totalorder %s19, 1
      %s268 = scalar_select %p267, %s19, 1
      %p269 = scmp.lt.s32.totalorder %s266, 1
      %s270 = scalar_select %p269, %s266, 1
      %s271 = smul.addr %s268, 2
      %s272 = sadd.s32 %s270, %s271
      %s273 = smul.addr %s272, 8
      %s274 = scalar_lea.vmem %s2, %s273
      %p275 = pneg %p118
      %p276 = pneg %p115
      %p277 = pneg %p139
      %p278 = pneg %p136
      %p279 = pneg %p167
      %p280 = pneg %p164
      %p281 = scmp.lt.s32.totalorder %s19, 1
      %s282 = scalar_select %p281, %s19, 1
      %p283 = scmp.lt.s32.totalorder %s20, 1
      %s284 = scalar_select %p283, %s20, 1
      %s285 = smul.addr %s282, 2
      %s286 = sadd.s32 %s284, %s285
      %s287 = smul.addr %s286, 8
      %s288 = scalar_lea.vmem %s4, %s287
      %p289 = scmp.lt.s32.totalorder %s19, 1
      %s290 = scalar_select %p289, %s19, 1
      %p291 = scmp.lt.s32.totalorder %s20, 1
      %s292 = scalar_select %p291, %s20, 1
      %s293 = smul.addr %s290, 2
      %s294 = sadd.s32 %s292, %s293
      %s295 = smul.addr %s294, 8
      %s296 = scalar_lea.vmem %s0, %s295
      %s297 = ssub.s32 %s20, 1
      %p298 = scmp.gt.s32.totalorder %s297, 0
      %s299 = scalar_select %p298, %s297, 0
      %p300 = scmp.lt.s32.totalorder %s19, 1
      %s301 = scalar_select %p300, %s19, 1
      %p302 = scmp.lt.s32.totalorder %s299, 1
      %s303 = scalar_select %p302, %s299, 1
      %s304 = smul.addr %s301, 2
      %s305 = sadd.s32 %s303, %s304
      %s306 = smul.addr %s305, 8
      %s307 = scalar_lea.vmem %s1, %s306
      %s308 = ssub.s32 %s20, 1
      %p309 = scmp.gt.s32.totalorder %s308, 0
      %s310 = scalar_select %p309, %s308, 0
      %s311 = sadd.s32 %s20, 1
      %p312 = scmp.lt.s32.totalorder %s311, 1
      %s313 = scalar_select %p312, %s311, 1
      %p314 = scmp.lt.s32.totalorder %s19, 1
      %s315 = scalar_select %p314, %s19, 1
      %p316 = scmp.lt.s32.totalorder %s313, 1
      %s317 = scalar_select %p316, %s313, 1
      %s318 = smul.addr %s315, 2
      %s319 = sadd.s32 %s317, %s318
      %s320 = smul.addr %s319, 8
      %s321 = scalar_lea.vmem %s2, %s320
      %s322 = sadd.s32 %s20, 1
      %p323 = scmp.lt.s32.totalorder %s322, 1
      %s324 = scalar_select %p323, %s322, 1
      %p325 = scmp.lt.s32.totalorder %s19, 1
      %s326 = scalar_select %p325, %s19, 1
      %p327 = scmp.lt.s32.totalorder %s20, 1
      %s328 = scalar_select %p327, %s20, 1
      %s329 = smul.addr %s326, 2
      %s330 = sadd.s32 %s328, %s329
      %s331 = smul.addr %s330, 8
      %s332 = scalar_lea.vmem %s4, %s331
      %p333 = scmp.eq.s32.totalorder %s20, 0
      // Predicated region
      $region37: #{upsample_forward.1} parent=35 // pred_check
        %p334 = pneg %p333
      $region38: #{upsample_forward.1} parent=35 // pred_check_branch
        %336 = sbr.rel (%p334) target = $region40
      $region39: #{upsample_forward.1} parent=35 // pred_region
        %vm337 = vcmask 1048448
        %338 = vst.msk [vmem:[#allocation2] sm:$0xff] %vm337, 0.0
      $region40: #{upsample_forward.1} parent=35 // pred_fallthru
        _
      %p339 = scmp.gt.s32.totalorder %s20, 0
      // Predicated region
      $region41: #{upsample_forward.1} parent=35 // pred_check
        %p340 = pneg %p339
      $region42: #{upsample_forward.1} parent=35 // pred_check_branch
        %342 = sbr.rel (%p340) target = $region44
      $region43: #{upsample_forward.1} parent=35 // pred_region
        %v343 = vld [vmem:[%s307] sm:$0xff]
        %vm344 = vcmask 1048448
        %345 = vst.msk [vmem:[#allocation2] sm:$0xff] %vm344, %v343
      $region44: #{upsample_forward.1} parent=35 // pred_fallthru
        _
      %p346 = scmp.eq.s32.totalorder %s20, 1
      // Predicated region
      $region45: #{upsample_forward.1} parent=35 // pred_check
        %p347 = pneg %p346
      $region46: #{upsample_forward.1} parent=35 // pred_check_branch
        %349 = sbr.rel (%p347) target = $region48
      $region47: #{upsample_forward.1} parent=35 // pred_region
        %vm350 = vcmask 130048
        %351 = vst.msk [vmem:[#allocation2 + $0x10] sm:$0xff] %vm350, 0.0
      $region48: #{upsample_forward.1} parent=35 // pred_fallthru
        _
      %p352 = scmp.lt.s32.totalorder %s20, 1
      // Predicated region
      $region49: #{upsample_forward.1} parent=35 // pred_check
        %p353 = pneg %p352
      $region50: #{upsample_forward.1} parent=35 // pred_check_branch
        %355 = sbr.rel (%p353) target = $region52
      $region51: #{upsample_forward.1} parent=35 // pred_region
        %v356 = vld [vmem:[%s321] sm:$0xff]
        %vm357 = vcmask 130048
        %358 = vst.msk [vmem:[#allocation2 + $0x10] sm:$0xff] %vm357, %v356
      $region52: #{upsample_forward.1} parent=35 // pred_fallthru
        _
      %v359 = vld [vmem:[%s296] sm:$0xff]
      %360 = vst [vmem:[#allocation2 + $0x8] sm:$0xff] %v359
      %v361 = vld [vmem:[#allocation2] sm:$0xff]
      %v362 = vld [vmem:[#allocation2 + $0x8] sm:$0xff]
      %365 = vrot.lane.b32.xlu0 %v361, 17
      %v366 = vpop.permute.xlu0 %365
      %367 = vrot.lane.b32.xlu0 %v362, 17
      %v368 = vpop.permute.xlu0 %367
      %vm369 = vcmask 138240
      %v370 = vsel %vm369, %v366, %v368
      %373 = vst [vmem:[#allocation3] sm:$0xff] %v370
      %vm374 = vcmask 15360
      %375 = vst.msk [vmem:[#allocation3 + $0x8] sm:$0xff] %vm374, %v368
      %v376 = vld [vmem:[#allocation2] sm:$0xff]
      %v377 = vld [vmem:[#allocation2 + $0x8] sm:$0xff]
      %v378 = vld [vmem:[#allocation2 + $0x10] sm:$0xff]
      %382 = vrot.lane.b32.xlu0 %v376, 1
      %v383 = vpop.permute.xlu0 %382
      %384 = vrot.lane.b32.xlu0 %v377, 1
      %v385 = vpop.permute.xlu0 %384
      %386 = vrot.lane.b32.xlu0 %v378, 1
      %v387 = vpop.permute.xlu0 %386
      %vm388 = vcmask 7168
      %v389 = vsel %vm388, %v383, %v385
      %v390 = vsel %vm388, %v385, %v387
      %393 = vst [vmem:[#allocation3 + $0x10] sm:$0xff] %v389
      %394 = vst.msk [vmem:[#allocation3 + $0x18] sm:$0xff] %vm374, %v390
      %v395 = vld [vmem:[#allocation2 + $0x8] sm:$0xff]
      %v396 = vld [vmem:[#allocation2 + $0x10] sm:$0xff]
      %399 = vrot.lane.b32.xlu0 %v395, 113
      %v400 = vpop.permute.xlu0 %399
      %401 = vrot.lane.b32.xlu0 %v396, 113
      %v402 = vpop.permute.xlu0 %401
      %vm403 = vcmask 924672
      %v404 = vsel %vm403, %v400, %v402
      %407 = vst [vmem:[#allocation3 + $0x20] sm:$0xff] %v404
      %408 = vst.msk [vmem:[#allocation3 + $0x28] sm:$0xff] %vm374, %v402
      %v409 = vlaneseq
      %v410 = vand.u32 %v409, 127
      %vm411 = vcmp.lt.s32.totalorder %v410, 0
      %v412 = vsub.s32 0, %v410
      %v413 = vsel %vm411, %v412, %v410
      %v414 = vshrl.u32 %v413, 4
      %v415 = vand.u32 %v413, 15
      %v416 = vsub.s32 0, %v415
      %v417 = vsel %vm411, %v416, %v415
      %vm418 = vcmp.ne.s32.totalorder %v417, 0
      %vm419 = vcmp.lt.s32.totalorder %v417, 0
      %vm420 = vmand %vm419, %vm418
      %v421 = vadd.s32 %v417, 16
      %v422 = vsel %vm420, %v421, %v417
      %vm423 = vcmp.ge.s32.totalorder %v422, 1
      %vm424 = vcmp.le.s32.totalorder %v422, 14
      %s425 = scalar_lea.vmem %s3, 8
      %v426 = vld [vmem:[%s425] sm:$0xff]
      %v427 = vld [vmem:[#allocation3] sm:$0xff]
      %v428 = vld [vmem:[#allocation3 + $0x8] sm:$0xff]
      %v429 = vld [vmem:[#allocation3 + $0x10] sm:$0xff]
      %v430 = vld [vmem:[#allocation3 + $0x18] sm:$0xff]
      %v431 = vld [vmem:[#allocation3 + $0x20] sm:$0xff]
      %v432 = vld [vmem:[#allocation3 + $0x28] sm:$0xff]
      %v433 = vld [vmem:[%s3] sm:$0xff]
      %vm434 = vcmask 195584
      %v436 = vsel %vm434, %v433, 0
      %438 = vmatprep.subr.mxu0 0.0
      %439 = vmatpush1.msra.mxu0 %v427
      %440 = vmatprep.subr.mxu0 0.0
      %441 = vmatpush1.msra.mxu0 %v429
      %442 = vmatprep.subr.mxu0 0.0
      %443 = vmatpush1.msra.mxu0 %v431
      %444 = vmatprep.subr.mxu0 0.0
      %445 = vmatpush1.msra.mxu0 0.0
      %446 = vmatprep.subr.mxu0 0.0
      %447 = vmatpush1.msra.mxu0 0.0
      %448 = vmatprep.subr.mxu0 0.0
      %449 = vmatpush1.msra.mxu0 0.0
      %450 = vmatprep.subr.mxu0 0.0
      %451 = vmatpush1.msra.mxu0 0.0
      %452 = vmatprep.subr.mxu0 0.0
      %453 = vmatpush1.msra.mxu0 0.0
      %454 = vmatprep.subr.mxu0 0.0
      %455 = vmatpush1.msra.mxu0 0.0
      %456 = vmatprep.subr.mxu0 0.0
      %457 = vmatpush1.msra.mxu0 0.0
      %458 = vmatprep.subr.mxu0 0.0
      %459 = vmatpush1.msra.mxu0 0.0
      %460 = vmatprep.subr.mxu0 0.0
      %461 = vmatpush1.msra.mxu0 0.0
      %462 = vmatprep.subr.mxu0 0.0
      %463 = vmatpush1.msra.mxu0 0.0
      %464 = vmatprep.subr.mxu0 0.0
      %465 = vmatpush1.msra.mxu0 0.0
      %466 = vmatprep.subr.mxu0 0.0
      %467 = vmatpush1.msra.mxu0 0.0
      %468 = vmatprep.subr.mxu0 0.0
      %469 = vmatpush1.msra.mxu0 0.0
      %470 = vmatprep.subr.mxu0 0.0
      %471 = vmatpush1.msra.mxu0 0.0
      %472 = vmatprep.subr.mxu0 0.0
      %473 = vmatpush1.msra.mxu0 0.0
      %474 = vmatprep.subr.mxu0 0.0
      %475 = vmatpush1.msra.mxu0 0.0
      %476 = vmatprep.subr.mxu0 0.0
      %477 = vmatpush1.msra.mxu0 0.0
      %478 = vmatprep.subr.mxu0 0.0
      %479 = vmatpush1.msra.mxu0 0.0
      %480 = vmatprep.subr.mxu0 0.0
      %481 = vmatpush1.msra.mxu0 0.0
      %482 = vmatprep.subr.mxu0 0.0
      %483 = vmatpush1.msra.mxu0 0.0
      %484 = vmatprep.subr.mxu0 0.0
      %485 = vmatpush1.msra.mxu0 0.0
      %486 = vmatprep.subr.mxu0 0.0
      %487 = vmatpush1.msra.mxu0 0.0
      %488 = vmatprep.subr.mxu0 0.0
      %489 = vmatpush1.msra.mxu0 0.0
      %490 = vmatprep.subr.mxu0 0.0
      %491 = vmatpush1.msra.mxu0 0.0
      %492 = vmatprep.subr.mxu0 0.0
      %493 = vmatpush1.msra.mxu0 0.0
      %494 = vmatprep.subr.mxu0 0.0
      %495 = vmatpush1.msra.mxu0 0.0
      %496 = vmatprep.subr.mxu0 0.0
      %497 = vmatpush1.msra.mxu0 0.0
      %498 = vmatprep.subr.mxu0 0.0
      %499 = vmatpush1.msra.mxu0 0.0
      %500 = vmatprep.subr.mxu0 0.0
      %501 = vmatpush1.msra.mxu0 0.0
      %502 = vmatprep.mubr.f32.mxu0 0.0
      %503 = vmatmul.mubr.f32.gmra.mrb[0].mxu0 %v436
      %v504 = vpop.f32.mrb[0].mxu0
      %v505 = vadd.f32 0.0, %v504
      %v506 = vpop.f32.mrb[0].mxu0
      %507 = vdwg.mxu0
      %v508 = vsel %vm423, 1, 0
      %vm509 = vcmp.eq.s32.totalorder %v508, 1
      %v510 = vsel %vm509, %v505, 0.0
      %517 = vrot.lane.b32.xlu0 %v427, 127
      %v518 = vpop.permute.xlu0 %517
      %519 = vrot.lane.b32.xlu0 %v428, 127
      %v520 = vpop.permute.xlu0 %519
      %521 = vrot.lane.b32.xlu0 %v429, 127
      %v522 = vpop.permute.xlu0 %521
      %523 = vrot.lane.b32.xlu0 %v430, 127
      %v524 = vpop.permute.xlu0 %523
      %525 = vrot.lane.b32.xlu0 %v431, 127
      %v526 = vpop.permute.xlu0 %525
      %527 = vrot.lane.b32.xlu0 %v432, 127
      %v528 = vpop.permute.xlu0 %527
      %vm529 = vcmask 1039360
      %v530 = vsel %vm529, %v518, %v520
      %v531 = vsel %vm529, %v522, %v524
      %v532 = vsel %vm529, %v526, %v528
      %v537 = vsel %vm434, %v426, 0
      %539 = vmatprep.subr.mxu0 0.0
      %540 = vmatpush1.msra.mxu0 %v530
      %541 = vmatprep.subr.mxu0 0.0
      %542 = vmatpush1.msra.mxu0 %v531
      %543 = vmatprep.subr.mxu0 0.0
      %544 = vmatpush1.msra.mxu0 %v532
      %545 = vmatprep.subr.mxu0 0.0
      %546 = vmatpush1.msra.mxu0 0.0
      %547 = vmatprep.subr.mxu0 0.0
      %548 = vmatpush1.msra.mxu0 0.0
      %549 = vmatprep.subr.mxu0 0.0
      %550 = vmatpush1.msra.mxu0 0.0
      %551 = vmatprep.subr.mxu0 0.0
      %552 = vmatpush1.msra.mxu0 0.0
      %553 = vmatprep.subr.mxu0 0.0
      %554 = vmatpush1.msra.mxu0 0.0
      %555 = vmatprep.subr.mxu0 0.0
      %556 = vmatpush1.msra.mxu0 0.0
      %557 = vmatprep.subr.mxu0 0.0
      %558 = vmatpush1.msra.mxu0 0.0
      %559 = vmatprep.subr.mxu0 0.0
      %560 = vmatpush1.msra.mxu0 0.0
      %561 = vmatprep.subr.mxu0 0.0
      %562 = vmatpush1.msra.mxu0 0.0
      %563 = vmatprep.subr.mxu0 0.0
      %564 = vmatpush1.msra.mxu0 0.0
      %565 = vmatprep.subr.mxu0 0.0
      %566 = vmatpush1.msra.mxu0 0.0
      %567 = vmatprep.subr.mxu0 0.0
      %568 = vmatpush1.msra.mxu0 0.0
      %569 = vmatprep.subr.mxu0 0.0
      %570 = vmatpush1.msra.mxu0 0.0
      %571 = vmatprep.subr.mxu0 0.0
      %572 = vmatpush1.msra.mxu0 0.0
      %573 = vmatprep.subr.mxu0 0.0
      %574 = vmatpush1.msra.mxu0 0.0
      %575 = vmatprep.subr.mxu0 0.0
      %576 = vmatpush1.msra.mxu0 0.0
      %577 = vmatprep.subr.mxu0 0.0
      %578 = vmatpush1.msra.mxu0 0.0
      %579 = vmatprep.subr.mxu0 0.0
      %580 = vmatpush1.msra.mxu0 0.0
      %581 = vmatprep.subr.mxu0 0.0
      %582 = vmatpush1.msra.mxu0 0.0
      %583 = vmatprep.subr.mxu0 0.0
      %584 = vmatpush1.msra.mxu0 0.0
      %585 = vmatprep.subr.mxu0 0.0
      %586 = vmatpush1.msra.mxu0 0.0
      %587 = vmatprep.subr.mxu0 0.0
      %588 = vmatpush1.msra.mxu0 0.0
      %589 = vmatprep.subr.mxu0 0.0
      %590 = vmatpush1.msra.mxu0 0.0
      %591 = vmatprep.subr.mxu0 0.0
      %592 = vmatpush1.msra.mxu0 0.0
      %593 = vmatprep.subr.mxu0 0.0
      %594 = vmatpush1.msra.mxu0 0.0
      %595 = vmatprep.subr.mxu0 0.0
      %596 = vmatpush1.msra.mxu0 0.0
      %597 = vmatprep.subr.mxu0 0.0
      %598 = vmatpush1.msra.mxu0 0.0
      %599 = vmatprep.subr.mxu0 0.0
      %600 = vmatpush1.msra.mxu0 0.0
      %601 = vmatprep.subr.mxu0 0.0
      %602 = vmatpush1.msra.mxu0 0.0
      %603 = vmatprep.mubr.f32.mxu0 0.0
      %604 = vmatmul.mubr.f32.gmra.mrb[0].mxu0 %v537
      %v605 = vpop.f32.mrb[0].mxu0
      %v606 = vadd.f32 %v510, %v605
      %v607 = vpop.f32.mrb[0].mxu0
      %608 = vdwg.mxu0
      %s609 = scalar_lea.vmem %s3, 16
      %v610 = vld [vmem:[%s609] sm:$0xff]
      %611 = vrot.lane.b32.xlu0 %v427, 126
      %v612 = vpop.permute.xlu0 %611
      %613 = vrot.lane.b32.xlu0 %v428, 126
      %v614 = vpop.permute.xlu0 %613
      %615 = vrot.lane.b32.xlu0 %v429, 126
      %v616 = vpop.permute.xlu0 %615
      %617 = vrot.lane.b32.xlu0 %v430, 126
      %v618 = vpop.permute.xlu0 %617
      %619 = vrot.lane.b32.xlu0 %v431, 126
      %v620 = vpop.permute.xlu0 %619
      %621 = vrot.lane.b32.xlu0 %v432, 126
      %v622 = vpop.permute.xlu0 %621
      %vm623 = vcmask 1031168
      %v624 = vsel %vm623, %v612, %v614
      %v625 = vsel %vm623, %v616, %v618
      %v626 = vsel %vm623, %v620, %v622
      %v631 = vsel %vm434, %v610, 0
      %633 = vmatprep.subr.mxu0 0.0
      %634 = vmatpush1.msra.mxu0 %v624
      %635 = vmatprep.subr.mxu0 0.0
      %636 = vmatpush1.msra.mxu0 %v625
      %637 = vmatprep.subr.mxu0 0.0
      %638 = vmatpush1.msra.mxu0 %v626
      %639 = vmatprep.subr.mxu0 0.0
      %640 = vmatpush1.msra.mxu0 0.0
      %641 = vmatprep.subr.mxu0 0.0
      %642 = vmatpush1.msra.mxu0 0.0
      %643 = vmatprep.subr.mxu0 0.0
      %644 = vmatpush1.msra.mxu0 0.0
      %645 = vmatprep.subr.mxu0 0.0
      %646 = vmatpush1.msra.mxu0 0.0
      %647 = vmatprep.subr.mxu0 0.0
      %648 = vmatpush1.msra.mxu0 0.0
      %649 = vmatprep.subr.mxu0 0.0
      %650 = vmatpush1.msra.mxu0 0.0
      %651 = vmatprep.subr.mxu0 0.0
      %652 = vmatpush1.msra.mxu0 0.0
      %653 = vmatprep.subr.mxu0 0.0
      %654 = vmatpush1.msra.mxu0 0.0
      %655 = vmatprep.subr.mxu0 0.0
      %656 = vmatpush1.msra.mxu0 0.0
      %657 = vmatprep.subr.mxu0 0.0
      %658 = vmatpush1.msra.mxu0 0.0
      %659 = vmatprep.subr.mxu0 0.0
      %660 = vmatpush1.msra.mxu0 0.0
      %661 = vmatprep.subr.mxu0 0.0
      %662 = vmatpush1.msra.mxu0 0.0
      %663 = vmatprep.subr.mxu0 0.0
      %664 = vmatpush1.msra.mxu0 0.0
      %665 = vmatprep.subr.mxu0 0.0
      %666 = vmatpush1.msra.mxu0 0.0
      %667 = vmatprep.subr.mxu0 0.0
      %668 = vmatpush1.msra.mxu0 0.0
      %669 = vmatprep.subr.mxu0 0.0
      %670 = vmatpush1.msra.mxu0 0.0
      %671 = vmatprep.subr.mxu0 0.0
      %672 = vmatpush1.msra.mxu0 0.0
      %673 = vmatprep.subr.mxu0 0.0
      %674 = vmatpush1.msra.mxu0 0.0
      %675 = vmatprep.subr.mxu0 0.0
      %676 = vmatpush1.msra.mxu0 0.0
      %677 = vmatprep.subr.mxu0 0.0
      %678 = vmatpush1.msra.mxu0 0.0
      %679 = vmatprep.subr.mxu0 0.0
      %680 = vmatpush1.msra.mxu0 0.0
      %681 = vmatprep.subr.mxu0 0.0
      %682 = vmatpush1.msra.mxu0 0.0
      %683 = vmatprep.subr.mxu0 0.0
      %684 = vmatpush1.msra.mxu0 0.0
      %685 = vmatprep.subr.mxu0 0.0
      %686 = vmatpush1.msra.mxu0 0.0
      %687 = vmatprep.subr.mxu0 0.0
      %688 = vmatpush1.msra.mxu0 0.0
      %689 = vmatprep.subr.mxu0 0.0
      %690 = vmatpush1.msra.mxu0 0.0
      %691 = vmatprep.subr.mxu0 0.0
      %692 = vmatpush1.msra.mxu0 0.0
      %693 = vmatprep.subr.mxu0 0.0
      %694 = vmatpush1.msra.mxu0 0.0
      %695 = vmatprep.subr.mxu0 0.0
      %696 = vmatpush1.msra.mxu0 0.0
      %697 = vmatprep.mubr.f32.mxu0 0.0
      %698 = vmatmul.mubr.f32.gmra.mrb[0].mxu0 %v631
      %v699 = vpop.f32.mrb[0].mxu0
      %v700 = vadd.f32 0.0, %v699
      %v701 = vpop.f32.mrb[0].mxu0
      %702 = vdwg.mxu0
      %v703 = vsel %vm424, 1, 0
      %vm704 = vcmp.eq.s32.totalorder %v703, 1
      %v705 = vsel %vm704, %v700, 0.0
      %v706 = vadd.f32 %v606, %v705
      %707 = vst [vmem:[%s332] sm:$0xff] %v706
      %p708 = scmp.lt.s32.totalorder %s19, 1
      %s709 = scalar_select %p708, %s19, 1
      %p710 = scmp.lt.s32.totalorder %s20, 1
      %s711 = scalar_select %p710, %s20, 1
      %s712 = smul.addr %s709, 2
      %s713 = sadd.s32 %s711, %s712
      %s714 = smul.addr %s713, 8
      %s715 = scalar_lea.vmem %s4, %s714
      // Predicated region
      $region53: #{upsample_forward.1} parent=35 // pred_check
        %p716 = pneg %p164
      $region54: #{upsample_forward.1} parent=35 // pred_check_branch
        %718 = sbr.rel (%p716) target = $region56
      $region55: #{upsample_forward.1} parent=35 // pred_region
        _
      $region56: #{upsample_forward.1} parent=35 // pred_fallthru
        _
    $region36: #{upsample_forward.1} parent=5 // pred_fallthru
      _
    %p719 = scmp.le.s32.totalorder 2, %s10
    // Predicated region
    $region57: #{upsample_forward.1} parent=5 // pred_check
      %p720 = pneg %p719
    $region58: #{upsample_forward.1} parent=5 // pred_check_branch
      %722 = sbr.rel (%p720) target = $region60
    $region59: #{upsample_forward.1} parent=5 // pred_region
      %s723 = ssub.s32 %s10, 2
      // Predicated region
      $region61: #{upsample_forward.1} parent=59 // pred_check
        %p724 = pneg %p170
      $region62: #{upsample_forward.1} parent=59 // pred_check_branch
        %726 = sbr.rel (%p724) target = $region64
      $region63: #{upsample_forward.1} parent=59 // pred_region
        %p727 = scmp.lt.s32.totalorder %s21, 1
        %s728 = scalar_select %p727, %s21, 1
        %p729 = scmp.lt.s32.totalorder %s22, 1
        %s730 = scalar_select %p729, %s22, 1
        %s731 = smul.addr %s728, 2
        %s732 = sadd.s32 %s730, %s731
        %s733 = smul.addr %s732, 8
        %s734 = scalar_lea.vmem %s4, %s733
      $region64: #{upsample_forward.1} parent=59 // pred_fallthru
        _
    $region60: #{upsample_forward.1} parent=5 // pred_fallthru
      _
  $region6: #{upsample_forward.1} parent=0 // loop_footer
    %s14 = sadd.s32 1, %s10
  $region7: #{upsample_forward.1} parent=0 // loop_footer_branch
    %9 = sbr.rel target = $region3
  $region8: #{upsample_forward.1} parent=0 // loop_exit
    _

</llo_original>
